<compile_context>
chip_gen: v6e
topology: v6e:2x2x1
jax: 0.10.0
libtpu: 0.0.40
codegen_flags: <defaults>
</compile_context>

<pallas_src>
import math

import jax
import jax.numpy as jnp
from jax.experimental import pallas as pl
from jax.experimental.pallas import tpu as pltpu


def _round_up(x, m):
    return ((x + m - 1) // m) * m


def _default_vmem_limit_bytes():
    """3/4 of physical VMEM (96 MiB on v5e/v6e, 48 MiB on v7x), with a safe fallback."""
    cap = 64 * 1024 * 1024
    try:
        info = pltpu.get_tpu_info()
        cap = int(getattr(info, "vmem_capacity_bytes", cap))
    except Exception:
        pass  # API drift / no TPU visible at trace time: stay conservative
    return min((cap * 3) // 4, 96 * 1024 * 1024)


def _estimate_vmem_bytes(bm, tk, tn1, n2_pad, w_itemsize, out_itemsize):
    """Rough budget: double-buffered I/O blocks + f32 scratch accumulators."""
    b = 2 * bm * tk * w_itemsize             # x blocks
    b += 2 * 2 * tk * tn1 * w_itemsize       # Wv + Wg blocks
    b += 2 * tn1 * n2_pad * w_itemsize       # W2 blocks
    b += 2 * (2 * tn1 + n2_pad) * 4          # bias blocks (f32)
    b += 2 * bm * n2_pad * out_itemsize      # output blocks
    b += (2 * bm * tn1 + bm * n2_pad) * 4    # acc_v, acc_g, acc_out scratch
    return b


# ----------------------------------------------------------------------------
# Fused kernel:  out = ((x @ Wv + bv) * silu(x @ Wg + bg)) @ W2 + b2
# grid = (M blocks, inner blocks j1, K blocks k)
# ----------------------------------------------------------------------------
def _ffn_glu_kernel(x_ref, wv_ref, wg_ref, bv_ref, bg_ref, w2_ref, b2_ref,
                    o_ref, acc_v, acc_g, acc_o):
    j1 = pl.program_id(1)
    k = pl.program_id(2)
    nj1 = pl.num_programs(1)
    nk = pl.num_programs(2)

    @pl.when((j1 == 0) & (k == 0))
    def _init_out():
        acc_o[...] = jnp.zeros_like(acc_o)

    @pl.when(k == 0)
    def _init_glu():
        acc_v[...] = jnp.zeros_like(acc_v)
        acc_g[...] = jnp.zeros_like(acc_g)

    x = x_ref[...]  # load once, feed both GLU matmuls
    acc_v[...] += jnp.dot(x, wv_ref[...], preferred_element_type=jnp.float32)
    acc_g[...] += jnp.dot(x, wg_ref[...], preferred_element_type=jnp.float32)

    @pl.when(k == nk - 1)
    def _glu_finalize():
        # Bias + SiLU once per (bm, tn1) tile, all in f32, then feed the second
        # matmul directly from VMEM (no HBM round-trip of the intermediate h).
        v = acc_v[...] + bv_ref[...].astype(jnp.float32)
        g = acc_g[...] + bg_ref[...].astype(jnp.float32)
        h = (v * (g * jax.nn.sigmoid(g))).astype(w2_ref.dtype)
        acc_o[...] += jnp.dot(h, w2_ref[...], preferred_element_type=jnp.float32)

    @pl.when((k == nk - 1) & (j1 == nj1 - 1))
    def _out_finalize():
        o_ref[...] = (acc_o[...] + b2_ref[...].astype(jnp.float32)).astype(o_ref.dtype)


# ----------------------------------------------------------------------------
# Parameter init (nn.Linear-style) and one-time packing
# ----------------------------------------------------------------------------
def init_feedforward_params(key, dim, dim_out=None, mult=4, dtype=jnp.float32):
    """uniform(-1/sqrt(fan_in), +1/sqrt(fan_in)); weights stored transposed (x @ W_t)."""
    dim_out = dim_out if dim_out is not None else dim
    inner = int(dim * mult)
    k1w, k1b, k2w, k2b = jax.random.split(key, 4)
    bound1 = 1.0 / math.sqrt(dim)
    bound2 = 1.0 / math.sqrt(inner)
    return {
        "w1_t": jax.random.uniform(k1w, (dim, 2 * inner), dtype, -bound1, bound1),
        "b1":   jax.random.uniform(k1b, (2 * inner,), dtype, -bound1, bound1),
        "w2_t": jax.random.uniform(k2w, (inner, dim_out), dtype, -bound2, bound2),
        "b2":   jax.random.uniform(k2b, (dim_out,), dtype, -bound2, bound2),
    }


def prepare_feedforward_params(params, *, compute_dtype=jnp.bfloat16,
                               bm=None, tn1=None, tk=None):
    """One-time packing (do at load time, NOT per forward call):
    split W1 into value/gate halves, pad everything to the kernel's tile grid,
    cast weights to the MXU compute dtype and biases to f32."""
    dim, two_inner = params["w1_t"].shape
    inner = two_inner // 2
    dim_out = params["w2_t"].shape[1]

    vmem_limit = _default_vmem_limit_bytes()
    big_vmem = vmem_limit >= 64 * 1024 * 1024        # v5e / v6e (128 MiB physical)
    if bm is None:
        bm = 512 if big_vmem else 256
    if tk is None:
        tk = 1024 if big_vmem else 512
    if tn1 is None:
        tn1 = 512

    tk = min(tk, _round_up(dim, 128))
    tn1 = min(tn1, _round_up(inner, 128))
    k_pad = _round_up(dim, tk)
    n1_pad = _round_up(inner, tn1)
    n2_pad = _round_up(dim_out, 128)

    def pad2(a, r, c):
        return jnp.pad(a, ((0, r - a.shape[0]), (0, c - a.shape[1])))

    wv = pad2(params["w1_t"][:, :inner], k_pad, n1_pad).astype(compute_dtype)
    wg = pad2(params["w1_t"][:, inner:], k_pad, n1_pad).astype(compute_dtype)
    w2 = pad2(params["w2_t"], n1_pad, n2_pad).astype(compute_dtype)
    bv = jnp.pad(params["b1"][:inner], (0, n1_pad - inner)).reshape(1, n1_pad).astype(jnp.float32)
    bg = jnp.pad(params["b1"][inner:], (0, n1_pad - inner)).reshape(1, n1_pad).astype(jnp.float32)
    b2 = jnp.pad(params["b2"], (0, n2_pad - dim_out)).reshape(1, n2_pad).astype(jnp.float32)

    return {
        "wv": wv, "wg": wg, "w2": w2, "bv": bv, "bg": bg, "b2": b2,
        "dim": dim, "inner": inner, "dim_out": dim_out,
        "k_pad": k_pad, "n1_pad": n1_pad, "n2_pad": n2_pad,
        "bm": bm, "tk": tk, "tn1": tn1,
        "compute_dtype": compute_dtype,
        "vmem_limit_bytes": vmem_limit,
    }


# ----------------------------------------------------------------------------
# FeedForward forward pass (glu=True, post_act_ln=False, eval mode)
# ----------------------------------------------------------------------------
def feed_forward(x, prepared):
    # TODO(synk): nn.Dropout(p=0.5) is a no-op in eval mode; training-mode
    # stochastic dropout is not implemented in this inference kernel.
    p = prepared
    dim, inner, dim_out = p["dim"], p["inner"], p["dim_out"]
    *lead, k_in = x.shape
    assert k_in == dim, f"expected last dim {dim}, got {k_in}"
    m = int(math.prod(lead)) if lead else 1
    out_dtype = x.dtype
    cdt = p["compute_dtype"]

    tk, tn1 = p["tk"], p["tn1"]
    k_pad, n1_pad, n2_pad = p["k_pad"], p["n1_pad"], p["n2_pad"]

    # --- choose the M tile for this batch ---
    bm = min(p["bm"], _round_up(m, 16))
    # Megacore (v7x has 2 TCs): prefer >= 2 blocks along the only parallel axis.
    if _round_up(m, bm) // bm < 2:
        half = _round_up((m + 1) // 2, 16)
        if 128 <= half < bm:
            bm = half
    # Respect the VMEM budget: shrink bm until double-buffered blocks + f32
    # accumulators fit with headroom.
    w_isize = jnp.dtype(cdt).itemsize
    o_isize = jnp.dtype(out_dtype).itemsize
    limit = p["vmem_limit_bytes"]
    while (bm > 16 and
           _estimate_vmem_bytes(bm, tk, tn1, n2_pad, w_isize, o_isize) > int(0.85 * limit)):
        bm = max(16, _round_up(bm // 2, 16))

    m_pad = _round_up(m, bm)

    x2d = x.reshape(m, dim)
    if (m_pad, k_pad) != (m, dim):
        x2d = jnp.pad(x2d, ((0, m_pad - m), (0, k_pad - dim)))
    x2d = x2d.astype(cdt)

    grid = (m_pad // bm, n1_pad // tn1, k_pad // tk)

    flops = 2 * m * dim * (2 * inner) + 2 * m * inner * dim_out
    bytes_accessed = ((m_pad * k_pad + 2 * k_pad * n1_pad + n1_pad * n2_pad) * w_isize
                      + (2 * n1_pad + n2_pad) * 4
                      + m_pad * n2_pad * o_isize)

    out = pl.pallas_call(
        _ffn_glu_kernel,
        out_shape=jax.ShapeDtypeStruct((m_pad, n2_pad), out_dtype),
        grid_spec=pltpu.PrefetchScalarGridSpec(
            num_scalar_prefetch=0,
            grid=grid,
            in_specs=[
                pl.BlockSpec((bm, tk), lambda i, j, k: (i, k)),        # x
                pl.BlockSpec((tk, tn1), lambda i, j, k: (k, j)),       # Wv
                pl.BlockSpec((tk, tn1), lambda i, j, k: (k, j)),       # Wg
                pl.BlockSpec((1, tn1), lambda i, j, k: (0, j)),        # bv
                pl.BlockSpec((1, tn1), lambda i, j, k: (0, j)),        # bg
                pl.BlockSpec((tn1, n2_pad), lambda i, j, k: (j, 0)),   # W2
                pl.BlockSpec((1, n2_pad), lambda i, j, k: (0, 0)),     # b2
            ],
            out_specs=pl.BlockSpec((bm, n2_pad), lambda i, j, k: (i, 0)),
            scratch_shapes=[
                pltpu.VMEM((bm, tn1), jnp.float32),      # acc_v
                pltpu.VMEM((bm, tn1), jnp.float32),      # acc_g
                pltpu.VMEM((bm, n2_pad), jnp.float32),   # acc_out
            ],
        ),
        compiler_params=pltpu.CompilerParams(
            dimension_semantics=("parallel", "arbitrary", "arbitrary"),
            vmem_limit_bytes=limit,
        ),
        cost_estimate=pl.CostEstimate(
            flops=flops,
            transcendentals=m * inner,          # sigmoid in the GLU epilogue
            bytes_accessed=int(bytes_accessed),
        ),
    )(x2d, p["wv"], p["wg"], p["bv"], p["bg"], p["w2"], p["b2"])

    out = out[:m, :dim_out]
    return out.reshape(*lead, dim_out)


# ----------------------------------------------------------------------------
# Pure-JAX reference (identical bf16-operand / f32-accumulate math)
# ----------------------------------------------------------------------------
def feed_forward_reference(x, params, *, compute_dtype=jnp.bfloat16):
    cd = compute_dtype
    *lead, dim = x.shape
    x2d = x.reshape(-1, dim)
    y = jnp.dot(x2d.astype(cd), params["w1_t"].astype(cd),
                preferred_element_type=jnp.float32) + params["b1"].astype(jnp.float32)
    inner = params["w1_t"].shape[1] // 2
    v, g = y[:, :inner], y[:, inner:]
    h = (v * (g * jax.nn.sigmoid(g))).astype(cd)
    out = jnp.dot(h, params["w2_t"].astype(cd),
                  preferred_element_type=jnp.float32) + params["b2"].astype(jnp.float32)
    return out.astype(x.dtype).reshape(*lead, -1)


if __name__ == "__main__":
    key = jax.random.PRNGKey(0)
    k_x, k_p = jax.random.split(key)

    batch, seq, dim, mult, dim_out = 2, 8, 32, 4, 32   # inner_dim = 128
    x = jax.random.normal(k_x, (batch, seq, dim), jnp.float32)
    params = init_feedforward_params(k_p, dim, dim_out=dim_out, mult=mult)
    prepared = prepare_feedforward_params(params)   # one-time weight packing

    out = feed_forward(x, prepared)
    out = jax.block_until_ready(out)
    assert out.shape == (batch, seq, dim_out)

    ref = feed_forward_reference(x, params)
    max_err = float(jnp.max(jnp.abs(out - ref)))
    assert jnp.allclose(out, ref, atol=2e-3, rtol=2e-3), f"max abs err = {max_err}"

    print("KERNEL_OK")
</pallas_src>

<mosaic_0001>
module attributes {stable_mosaic.version = 11 : i64} {
  func.func @_ffn_glu_kernel(%arg0: i32, %arg1: i32, %arg2: i32, %arg3: memref<16x128xbf16, #tpu.memory_space<vmem>>, %arg4: memref<128x128xbf16, #tpu.memory_space<vmem>>, %arg5: memref<128x128xbf16, #tpu.memory_space<vmem>>, %arg6: memref<1x128xf32, #tpu.memory_space<vmem>>, %arg7: memref<1x128xf32, #tpu.memory_space<vmem>>, %arg8: memref<128x128xbf16, #tpu.memory_space<vmem>>, %arg9: memref<1x128xf32, #tpu.memory_space<vmem>>, %arg10: memref<16x128xf32, #tpu.memory_space<vmem>>, %arg11: memref<16x128xf32, #tpu.memory_space<vmem>>, %arg12: memref<16x128xf32, #tpu.memory_space<vmem>>, %arg13: memref<16x128xf32, #tpu.memory_space<vmem>>) attributes {dimension_semantics = [#tpu.dimension_semantics<parallel>, #tpu.dimension_semantics<arbitrary>, #tpu.dimension_semantics<arbitrary>], iteration_bounds = array<i64: 1, 1, 1>, scalar_prefetch = 0 : i64, scratch_operands = 3 : i64, tpu.core_type = #tpu.core_type<tc>, window_params = [{transform_indices = @transform_0, window_bounds = array<i64: 16, 128>}, {transform_indices = @transform_1, window_bounds = array<i64: 128, 128>}, {transform_indices = @transform_2, window_bounds = array<i64: 128, 128>}, {transform_indices = @transform_3, window_bounds = array<i64: 1, 128>}, {transform_indices = @transform_4, window_bounds = array<i64: 1, 128>}, {transform_indices = @transform_5, window_bounds = array<i64: 128, 128>}, {pipeline_mode = #tpu.pipeline_mode<synchronous>, transform_indices = @transform_6, window_bounds = array<i64: 1, 128>}, {transform_indices = @transform_7, window_bounds = array<i64: 16, 128>}]} {
    %c0_i32 = arith.constant 0 : i32
    %0 = arith.cmpi eq, %arg1, %c0_i32 : i32
    %c0_i32_0 = arith.constant 0 : i32
    %1 = arith.cmpi eq, %arg2, %c0_i32_0 : i32
    %2 = arith.andi %0, %1 : i1
    %3 = arith.extui %2 : i1 to i32
    %c0_i32_1 = arith.constant 0 : i32
    %4 = arith.cmpi ne, %3, %c0_i32_1 : i32
    scf.if %4 {
      %cst_23 = arith.constant 0.000000e+00 : f32
      %27 = vector.broadcast %cst_23 : f32 to vector<16x128xf32>
      %c0_24 = arith.constant 0 : index
      %c0_25 = arith.constant 0 : index
      %28 = vector.load %arg13[%c0_24, %c0_25] : memref<16x128xf32, #tpu.memory_space<vmem>>, vector<16x128xf32>
      tpu.vector_store %arg13[%c0_24, %c0_25], %27 {strides = array<i32>} : memref<16x128xf32, #tpu.memory_space<vmem>>, vector<16x128xf32>,
    } else {
    }
    %c0_i32_2 = arith.constant 0 : i32
    %5 = arith.cmpi eq, %arg2, %c0_i32_2 : i32
    %6 = arith.extui %5 : i1 to i32
    %c0_i32_3 = arith.constant 0 : i32
    %7 = arith.cmpi ne, %6, %c0_i32_3 : i32
    scf.if %7 {
      %cst_23 = arith.constant 0.000000e+00 : f32
      %27 = vector.broadcast %cst_23 : f32 to vector<16x128xf32>
      %c0_24 = arith.constant 0 : index
      %c0_25 = arith.constant 0 : index
      %28 = vector.load %arg11[%c0_24, %c0_25] : memref<16x128xf32, #tpu.memory_space<vmem>>, vector<16x128xf32>
      tpu.vector_store %arg11[%c0_24, %c0_25], %27 {strides = array<i32>} : memref<16x128xf32, #tpu.memory_space<vmem>>, vector<16x128xf32>,
      %cst_26 = arith.constant 0.000000e+00 : f32
      %29 = vector.broadcast %cst_26 : f32 to vector<16x128xf32>
      %c0_27 = arith.constant 0 : index
      %c0_28 = arith.constant 0 : index
      %30 = vector.load %arg12[%c0_27, %c0_28] : memref<16x128xf32, #tpu.memory_space<vmem>>, vector<16x128xf32>
      tpu.vector_store %arg12[%c0_27, %c0_28], %29 {strides = array<i32>} : memref<16x128xf32, #tpu.memory_space<vmem>>, vector<16x128xf32>,
    } else {
    }
    %c0 = arith.constant 0 : index
    %c0_4 = arith.constant 0 : index
    %8 = vector.load %arg3[%c0, %c0_4] : memref<16x128xbf16, #tpu.memory_space<vmem>>, vector<16x128xbf16>
    %c0_5 = arith.constant 0 : index
    %c0_6 = arith.constant 0 : index
    %9 = vector.load %arg11[%c0_5, %c0_6] : memref<16x128xf32, #tpu.memory_space<vmem>>, vector<16x128xf32>
    %c0_7 = arith.constant 0 : index
    %c0_8 = arith.constant 0 : index
    %10 = vector.load %arg4[%c0_7, %c0_8] : memref<128x128xbf16, #tpu.memory_space<vmem>>, vector<128x128xbf16>
    %cst = arith.constant dense<0.000000e+00> : vector<16x128xf32>
    %11 = tpu.matmul %8, %10, %cst {dimension_numbers = #tpu.dot_dimension_numbers<[1], [0], [0], [1], [0, 0, 1, 1], [], []>} : vector<16x128xbf16>, vector<128x128xbf16>, vector<16x128xf32> -> vector<16x128xf32>
    %12 = arith.addf %9, %11 : vector<16x128xf32>
    %c0_9 = arith.constant 0 : index
    %c0_10 = arith.constant 0 : index
    %13 = vector.load %arg11[%c0_9, %c0_10] : memref<16x128xf32, #tpu.memory_space<vmem>>, vector<16x128xf32>
    tpu.vector_store %arg11[%c0_9, %c0_10], %12 {strides = array<i32>} : memref<16x128xf32, #tpu.memory_space<vmem>>, vector<16x128xf32>,
    %c0_11 = arith.constant 0 : index
    %c0_12 = arith.constant 0 : index
    %14 = vector.load %arg12[%c0_11, %c0_12] : memref<16x128xf32, #tpu.memory_space<vmem>>, vector<16x128xf32>
    %c0_13 = arith.constant 0 : index
    %c0_14 = arith.constant 0 : index
    %15 = vector.load %arg5[%c0_13, %c0_14] : memref<128x128xbf16, #tpu.memory_space<vmem>>, vector<128x128xbf16>
    %cst_15 = arith.constant dense<0.000000e+00> : vector<16x128xf32>
    %16 = tpu.matmul %8, %15, %cst_15 {dimension_numbers = #tpu.dot_dimension_numbers<[1], [0], [0], [1], [0, 0, 1, 1], [], []>} : vector<16x128xbf16>, vector<128x128xbf16>, vector<16x128xf32> -> vector<16x128xf32>
    %17 = arith.addf %14, %16 : vector<16x128xf32>
    %c0_16 = arith.constant 0 : index
    %c0_17 = arith.constant 0 : index
    %18 = vector.load %arg12[%c0_16, %c0_17] : memref<16x128xf32, #tpu.memory_space<vmem>>, vector<16x128xf32>
    tpu.vector_store %arg12[%c0_16, %c0_17], %17 {strides = array<i32>} : memref<16x128xf32, #tpu.memory_space<vmem>>, vector<16x128xf32>,
    %c0_i32_18 = arith.constant 0 : i32
    %19 = arith.cmpi eq, %arg2, %c0_i32_18 : i32
    %20 = arith.extui %19 : i1 to i32
    %c0_i32_19 = arith.constant 0 : i32
    %21 = arith.cmpi ne, %20, %c0_i32_19 : i32
    scf.if %21 {
      %c0_23 = arith.constant 0 : index
      %c0_24 = arith.constant 0 : index
      %27 = vector.load %arg11[%c0_23, %c0_24] : memref<16x128xf32, #tpu.memory_space<vmem>>, vector<16x128xf32>
      %c0_25 = arith.constant 0 : index
      %c0_26 = arith.constant 0 : index
      %28 = vector.load %arg6[%c0_25, %c0_26] : memref<1x128xf32, #tpu.memory_space<vmem>>, vector<1x128xf32>
      %29 = vector.broadcast %28 : vector<1x128xf32> to vector<16x128xf32>
      %30 = arith.addf %27, %29 : vector<16x128xf32>
      %c0_27 = arith.constant 0 : index
      %c0_28 = arith.constant 0 : index
      %31 = vector.load %arg12[%c0_27, %c0_28] : memref<16x128xf32, #tpu.memory_space<vmem>>, vector<16x128xf32>
      %c0_29 = arith.constant 0 : index
      %c0_30 = arith.constant 0 : index
      %32 = vector.load %arg7[%c0_29, %c0_30] : memref<1x128xf32, #tpu.memory_space<vmem>>, vector<1x128xf32>
      %33 = vector.broadcast %32 : vector<1x128xf32> to vector<16x128xf32>
      %34 = arith.addf %31, %33 : vector<16x128xf32>
      %35 = arith.negf %34 : vector<16x128xf32>
      %36 = math.exp %35 : vector<16x128xf32>
      %cst_31 = arith.constant 1.000000e+00 : f32
      %37 = vector.broadcast %cst_31 : f32 to vector<16x128xf32>
      %38 = arith.addf %37, %36 : vector<16x128xf32>
      %39 = arith.divf %37, %38 : vector<16x128xf32>
      %40 = arith.mulf %34, %39 : vector<16x128xf32>
      %41 = arith.mulf %30, %40 : vector<16x128xf32>
      %42 = arith.truncf %41 : vector<16x128xf32> to vector<16x128xbf16>
      %c0_32 = arith.constant 0 : index
      %c0_33 = arith.constant 0 : index
      %43 = vector.load %arg13[%c0_32, %c0_33] : memref<16x128xf32, #tpu.memory_space<vmem>>, vector<16x128xf32>
      %c0_34 = arith.constant 0 : index
      %c0_35 = arith.constant 0 : index
      %44 = vector.load %arg8[%c0_34, %c0_35] : memref<128x128xbf16, #tpu.memory_space<vmem>>, vector<128x128xbf16>
      %cst_36 = arith.constant dense<0.000000e+00> : vector<16x128xf32>
      %45 = tpu.matmul %42, %44, %cst_36 {dimension_numbers = #tpu.dot_dimension_numbers<[1], [0], [0], [1], [0, 0, 1, 1], [], []>} : vector<16x128xbf16>, vector<128x128xbf16>, vector<16x128xf32> -> vector<16x128xf32>
      %46 = arith.addf %43, %45 : vector<16x128xf32>
      %c0_37 = arith.constant 0 : index
      %c0_38 = arith.constant 0 : index
      %47 = vector.load %arg13[%c0_37, %c0_38] : memref<16x128xf32, #tpu.memory_space<vmem>>, vector<16x128xf32>
      tpu.vector_store %arg13[%c0_37, %c0_38], %46 {strides = array<i32>} : memref<16x128xf32, #tpu.memory_space<vmem>>, vector<16x128xf32>,
    } else {
    }
    %c0_i32_20 = arith.constant 0 : i32
    %22 = arith.cmpi eq, %arg2, %c0_i32_20 : i32
    %c0_i32_21 = arith.constant 0 : i32
    %23 = arith.cmpi eq, %arg1, %c0_i32_21 : i32
    %24 = arith.andi %22, %23 : i1
    %25 = arith.extui %24 : i1 to i32
    %c0_i32_22 = arith.constant 0 : i32
    %26 = arith.cmpi ne, %25, %c0_i32_22 : i32
    scf.if %26 {
      %c0_23 = arith.constant 0 : index
      %c0_24 = arith.constant 0 : index
      %27 = vector.load %arg13[%c0_23, %c0_24] : memref<16x128xf32, #tpu.memory_space<vmem>>, vector<16x128xf32>
      %c0_25 = arith.constant 0 : index
      %c0_26 = arith.constant 0 : index
      %28 = vector.load %arg9[%c0_25, %c0_26] : memref<1x128xf32, #tpu.memory_space<vmem>>, vector<1x128xf32>
      %29 = vector.broadcast %28 : vector<1x128xf32> to vector<16x128xf32>
      %30 = arith.addf %27, %29 : vector<16x128xf32>
      %c0_27 = arith.constant 0 : index
      %c0_28 = arith.constant 0 : index
      %31 = vector.load %arg10[%c0_27, %c0_28] : memref<16x128xf32, #tpu.memory_space<vmem>>, vector<16x128xf32>
      tpu.vector_store %arg10[%c0_27, %c0_28], %30 {strides = array<i32>} : memref<16x128xf32, #tpu.memory_space<vmem>>, vector<16x128xf32>,
    } else {
    }
    return
  }
  func.func @transform_0(%arg0: i32, %arg1: i32, %arg2: i32) -> (i32, i32) {
    %c0_i32 = arith.constant 0 : i32
    return %arg0, %arg2 : i32, i32
  }
  func.func @transform_1(%arg0: i32, %arg1: i32, %arg2: i32) -> (i32, i32) {
    %c0_i32 = arith.constant 0 : i32
    return %arg2, %arg1 : i32, i32
  }
  func.func @transform_2(%arg0: i32, %arg1: i32, %arg2: i32) -> (i32, i32) {
    %c0_i32 = arith.constant 0 : i32
    return %arg2, %arg1 : i32, i32
  }
  func.func @transform_3(%arg0: i32, %arg1: i32, %arg2: i32) -> (i32, i32) {
    %c0_i32 = arith.constant 0 : i32
    %c0_i32_0 = arith.constant 0 : i32
    return %c0_i32, %arg1 : i32, i32
  }
  func.func @transform_4(%arg0: i32, %arg1: i32, %arg2: i32) -> (i32, i32) {
    %c0_i32 = arith.constant 0 : i32
    %c0_i32_0 = arith.constant 0 : i32
    return %c0_i32, %arg1 : i32, i32
  }
  func.func @transform_5(%arg0: i32, %arg1: i32, %arg2: i32) -> (i32, i32) {
    %c0_i32 = arith.constant 0 : i32
    %c0_i32_0 = arith.constant 0 : i32
    return %arg1, %c0_i32 : i32, i32
  }
  func.func @transform_6(%arg0: i32, %arg1: i32, %arg2: i32) -> (i32, i32) {
    %c0_i32 = arith.constant 0 : i32
    %c0_i32_0 = arith.constant 0 : i32
    %c0_i32_1 = arith.constant 0 : i32
    return %c0_i32, %c0_i32_0 : i32, i32
  }
  func.func @transform_7(%arg0: i32, %arg1: i32, %arg2: i32) -> (i32, i32) {
    %c0_i32 = arith.constant 0 : i32
    %c0_i32_0 = arith.constant 0 : i32
    return %arg0, %c0_i32 : i32, i32
  }
}

</mosaic_0001>

<llo_original>
// kernel: tpu_custom_call.1
$region0: #{tpu_custom_call.1}
  #allocation0 [shape = 'u32[]', space=smem, size = 0x4, offset = 0x4, fixed_abs, tag = 'smem constant byte address 0x4 - core index']
  #allocation1 [shape = 'u32[144,128]{1,0:T(1,128)}', space=vmem, size = 0x12000, scoped, tag = 'internal scratch']
  #allocation2 [shape = 'f32[16,128]{1,0:T(8,128)}', space=vmem, size = 0x2000, scoped, tag = 'scratch operand']
  #allocation3 [shape = 'f32[16,128]{1,0:T(8,128)}', space=vmem, size = 0x2000, scoped, tag = 'scratch operand']
  #allocation4 [shape = 'f32[16,128]{1,0:T(8,128)}', space=vmem, size = 0x2000, scoped, tag = 'scratch operand']
  %s0 = inlined_call_operand.hbm [shape: bf16[16,128], index: 0, kind: input, shape index: {}]
  %s1 = inlined_call_operand.hbm [shape: bf16[128,128], index: 1, kind: input, shape index: {}]
  %s2 = inlined_call_operand.hbm [shape: bf16[128,128], index: 2, kind: input, shape index: {}]
  %s3 = inlined_call_operand.vmem [shape: f32[1,128], index: 3, kind: input, shape index: {}]
  %s4 = inlined_call_operand.vmem [shape: f32[1,128], index: 4, kind: input, shape index: {}]
  %s5 = inlined_call_operand.hbm [shape: bf16[128,128], index: 5, kind: input, shape index: {}]
  %s6 = inlined_call_operand.vmem [shape: f32[1,128], index: 6, kind: input, shape index: {}]
  %s7 = inlined_call_operand.hbm [shape: f32[16,128], index: 7, kind: output, shape index: {}]
  %s8 = sld [smem:[#allocation0]]
  $region70: #{tpu_custom_call.1} parent=0
    _
  %s10 = ssub.s32 1, %s8
  %s11 = scalar_select 0, %s10, %s8
  $region1: #{tpu_custom_call.1} parent=0
    #allocation5 [shape = 'u8[4096]{0}', space=vmem, size = 0x1000, scoped, tag = 'input window, operand 0, single buffered']
    #allocation6 [shape = 's32[1]{0}', space=sflag, size = 0x4, scoped, tag = 'scoped memory for tpu_custom_call.1']
    #allocation7 [shape = 's32[1]{0}', space=sflag, size = 0x4, scoped, tag = 'scoped memory for tpu_custom_call.1']
    #allocation8 [shape = 'u8[32768]{0}', space=vmem, size = 0x8000, scoped, tag = 'input window, operand 1, single buffered']
    #allocation9 [shape = 's32[1]{0}', space=sflag, size = 0x4, scoped, tag = 'scoped memory for tpu_custom_call.1']
    #allocation10 [shape = 'u8[32768]{0}', space=vmem, size = 0x8000, scoped, tag = 'input window, operand 2, single buffered']
    #allocation11 [shape = 'u8[32768]{0}', space=vmem, size = 0x8000, scoped, tag = 'input window, operand 5, single buffered']
    #allocation12 [shape = 's32[1]{0}', space=sflag, size = 0x4, scoped, tag = 'scoped memory for tpu_custom_call.1']
    #allocation13 [shape = 'u8[8192]{0}', space=vmem, size = 0x2000, scoped, tag = 'output window, operand 0, single buffered']
    %12 = vsyncpa [#allocation6], 0
    %13 = vsyncpa [#allocation9], 0
    %14 = vsyncpa [#allocation12], 0
    %15 = vsyncpa [#allocation7], 0
    // Predicated region
    $region2: #{tpu_custom_call.1} parent=1 // pred_check
      _
    $region3: #{tpu_custom_call.1} parent=1 // pred_check_branch
      %17 = sbr.rel (0) target = $region5
    $region4: #{tpu_custom_call.1} parent=1 // pred_region
      %s19 = ssub.s32 128, 128
      %20 = vsyncadd [#allocation6], %s19
      %s21 = sshll.u32 [#allocation5], 4
      %s22 = int_to_ptr.vmem [resolvable:$true] %s21
      %27 = dma.hbm_to_vmem [thread:$0]  %s0, 128, %s22, [#allocation6], 64, 64, 4
    $region5: #{tpu_custom_call.1} parent=1 // pred_fallthru
      _
    // Predicated region
    $region6: #{tpu_custom_call.1} parent=1 // pred_check
      _
    $region7: #{tpu_custom_call.1} parent=1 // pred_check_branch
      %29 = sbr.rel (0) target = $region9
    $region8: #{tpu_custom_call.1} parent=1 // pred_region
      %s31 = ssub.s32 1024, 1024
      %32 = vsyncadd [#allocation9], %s31
      %s33 = sshll.u32 [#allocation8], 4
      %s34 = int_to_ptr.vmem [resolvable:$true] %s33
      %39 = dma.hbm_to_vmem [thread:$0]  %s1, 1024, %s34, [#allocation9], 64, 64, 4
    $region9: #{tpu_custom_call.1} parent=1 // pred_fallthru
      _
    // Predicated region
    $region10: #{tpu_custom_call.1} parent=1 // pred_check
      _
    $region11: #{tpu_custom_call.1} parent=1 // pred_check_branch
      %41 = sbr.rel (0) target = $region13
    $region12: #{tpu_custom_call.1} parent=1 // pred_region
      %s43 = ssub.s32 1024, 1024
      %44 = vsyncadd [#allocation9], %s43
      %s45 = sshll.u32 [#allocation10], 4
      %s46 = int_to_ptr.vmem [resolvable:$true] %s45
      %51 = dma.hbm_to_vmem [thread:$0]  %s2, 1024, %s46, [#allocation9], 64, 64, 4
    $region13: #{tpu_custom_call.1} parent=1 // pred_fallthru
      _
    // Predicated region
    $region14: #{tpu_custom_call.1} parent=1 // pred_check
      _
    $region15: #{tpu_custom_call.1} parent=1 // pred_check_branch
      %53 = sbr.rel (0) target = $region17
    $region16: #{tpu_custom_call.1} parent=1 // pred_region
      _
    $region17: #{tpu_custom_call.1} parent=1 // pred_fallthru
      _
    // Predicated region
    $region18: #{tpu_custom_call.1} parent=1 // pred_check
      _
    $region19: #{tpu_custom_call.1} parent=1 // pred_check_branch
      %55 = sbr.rel (0) target = $region21
    $region20: #{tpu_custom_call.1} parent=1 // pred_region
      _
    $region21: #{tpu_custom_call.1} parent=1 // pred_fallthru
      _
    // Predicated region
    $region22: #{tpu_custom_call.1} parent=1 // pred_check
      _
    $region23: #{tpu_custom_call.1} parent=1 // pred_check_branch
      %57 = sbr.rel (0) target = $region25
    $region24: #{tpu_custom_call.1} parent=1 // pred_region
      %s59 = ssub.s32 1024, 1024
      %60 = vsyncadd [#allocation12], %s59
      %s61 = sshll.u32 [#allocation11], 4
      %s62 = int_to_ptr.vmem [resolvable:$true] %s61
      %67 = dma.hbm_to_vmem [thread:$0]  %s5, 1024, %s62, [#allocation12], 64, 64, 4
    $region25: #{tpu_custom_call.1} parent=1 // pred_fallthru
      _
    // Predicated region
    $region26: #{tpu_custom_call.1} parent=1 // pred_check
      _
    $region27: #{tpu_custom_call.1} parent=1 // pred_check_branch
      %69 = sbr.rel (0) target = $region29
    $region28: #{tpu_custom_call.1} parent=1 // pred_region
      _
    $region29: #{tpu_custom_call.1} parent=1 // pred_fallthru
      _
    // Predicated region
    $region30: #{tpu_custom_call.1} parent=1 // pred_check
      _
    $region31: #{tpu_custom_call.1} parent=1 // pred_check_branch
      %71 = sbr.rel (0) target = $region33
    $region32: #{tpu_custom_call.1} parent=1 // pred_region
      %72 = dma.done [#allocation6], 128
    $region33: #{tpu_custom_call.1} parent=1 // pred_fallthru
      _
    // Predicated region
    $region34: #{tpu_custom_call.1} parent=1 // pred_check
      _
    $region35: #{tpu_custom_call.1} parent=1 // pred_check_branch
      %74 = sbr.rel (0) target = $region37
    $region36: #{tpu_custom_call.1} parent=1 // pred_region
      %75 = dma.done [#allocation9], 1024
    $region37: #{tpu_custom_call.1} parent=1 // pred_fallthru
      _
    // Predicated region
    $region38: #{tpu_custom_call.1} parent=1 // pred_check
      _
    $region39: #{tpu_custom_call.1} parent=1 // pred_check_branch
      %77 = sbr.rel (0) target = $region41
    $region40: #{tpu_custom_call.1} parent=1 // pred_region
      %78 = dma.done [#allocation9], 1024
    $region41: #{tpu_custom_call.1} parent=1 // pred_fallthru
      _
    // Predicated region
    $region42: #{tpu_custom_call.1} parent=1 // pred_check
      _
    $region43: #{tpu_custom_call.1} parent=1 // pred_check_branch
      %80 = sbr.rel (0) target = $region45
    $region44: #{tpu_custom_call.1} parent=1 // pred_region
      %81 = dma.done [#allocation12], 1024
    $region45: #{tpu_custom_call.1} parent=1 // pred_fallthru
      _
    %p83 = scmp.eq.s32.totalorder 0, 0
    %p84 = scmp.eq.s32.totalorder 0, 0
    %p85 = pnand %p83, %p84
    %p86 = pneg %p85
    // Predicated region
    $region46: #{tpu_custom_call.1} parent=1 // pred_check
      _
    $region47: #{tpu_custom_call.1} parent=1 // pred_check_branch
      %88 = sbr.rel (%p85) target = $region49
    $region48: #{tpu_custom_call.1} parent=1 // pred_region
      %89 = vst [vmem:[#allocation4] sm:$0xff] 0.0
      %90 = vst [vmem:[#allocation4 + $0x8] sm:$0xff] 0.0
    $region49: #{tpu_custom_call.1} parent=1 // pred_fallthru
      _
    // Predicated region
    $region50: #{tpu_custom_call.1} parent=1 // pred_check
      %p91 = pneg %p84
    $region51: #{tpu_custom_call.1} parent=1 // pred_check_branch
      %93 = sbr.rel (%p91) target = $region53
    $region52: #{tpu_custom_call.1} parent=1 // pred_region
      %94 = vst [vmem:[#allocation2] sm:$0xff] 0.0
      %95 = vst [vmem:[#allocation2 + $0x8] sm:$0xff] 0.0
      %96 = vst [vmem:[#allocation3] sm:$0xff] 0.0
      %97 = vst [vmem:[#allocation3 + $0x8] sm:$0xff] 0.0
    $region53: #{tpu_custom_call.1} parent=1 // pred_fallthru
      _
    %v98 = vld [vmem:[#allocation5] sm:$0xf]
    %v99 = vld [vmem:[#allocation5 + $0x4] sm:$0xf]
    %v100 = vld [vmem:[#allocation2] sm:$0xff]
    %v101 = vld [vmem:[#allocation2 + $0x8] sm:$0xff]
    %v102 = vld [vmem:[#allocation8] sm:$0xf]
    %v103 = vld [vmem:[#allocation8 + $0x4] sm:$0xf]
    %v104 = vld [vmem:[#allocation8 + $0x8] sm:$0xf]
    %v105 = vld [vmem:[#allocation8 + $0xc] sm:$0xf]
    %v106 = vld [vmem:[#allocation8 + $0x10] sm:$0xf]
    %v107 = vld [vmem:[#allocation8 + $0x14] sm:$0xf]
    %v108 = vld [vmem:[#allocation8 + $0x18] sm:$0xf]
    %v109 = vld [vmem:[#allocation8 + $0x1c] sm:$0xf]
    %v110 = vld [vmem:[#allocation8 + $0x20] sm:$0xf]
    %v111 = vld [vmem:[#allocation8 + $0x24] sm:$0xf]
    %v112 = vld [vmem:[#allocation8 + $0x28] sm:$0xf]
    %v113 = vld [vmem:[#allocation8 + $0x2c] sm:$0xf]
    %v114 = vld [vmem:[#allocation8 + $0x30] sm:$0xf]
    %v115 = vld [vmem:[#allocation8 + $0x34] sm:$0xf]
    %v116 = vld [vmem:[#allocation8 + $0x38] sm:$0xf]
    %v117 = vld [vmem:[#allocation8 + $0x3c] sm:$0xf]
    %v120 = vunpack.c.l.b16 %v98
    %v121 = vunpack.c.l.b16 %v99
    %v122 = vpack.c.b16 %v121, %v120
    %v140 = vunpack.c.l.b16 %v102
    %v141 = vunpack.c.l.b16 %v103
    %v142 = vunpack.c.l.b16 %v104
    %v143 = vunpack.c.l.b16 %v105
    %v144 = vunpack.c.l.b16 %v106
    %v145 = vunpack.c.l.b16 %v107
    %v146 = vunpack.c.l.b16 %v108
    %v147 = vunpack.c.l.b16 %v109
    %v148 = vunpack.c.l.b16 %v110
    %v149 = vunpack.c.l.b16 %v111
    %v150 = vunpack.c.l.b16 %v112
    %v151 = vunpack.c.l.b16 %v113
    %v152 = vunpack.c.l.b16 %v114
    %v153 = vunpack.c.l.b16 %v115
    %v154 = vunpack.c.l.b16 %v116
    %v155 = vunpack.c.l.b16 %v117
    %v156 = vpack.c.b16 %v141, %v140
    %v157 = vpack.c.b16 %v143, %v142
    %v158 = vpack.c.b16 %v145, %v144
    %v159 = vpack.c.b16 %v147, %v146
    %v160 = vpack.c.b16 %v149, %v148
    %v161 = vpack.c.b16 %v151, %v150
    %v162 = vpack.c.b16 %v153, %v152
    %v163 = vpack.c.b16 %v155, %v154
    %172 = vmatprep.subr.bf16.mxu0 0
    %173 = vmatpush1.bf16.msra.mxu0 %v163
    %174 = vmatprep.subr.bf16.mxu0 0
    %175 = vmatpush1.bf16.msra.mxu0 %v162
    %176 = vmatprep.subr.bf16.mxu0 0
    %177 = vmatpush1.bf16.msra.mxu0 %v161
    %178 = vmatprep.subr.bf16.mxu0 0
    %179 = vmatpush1.bf16.msra.mxu0 %v160
    %180 = vmatprep.subr.bf16.mxu0 0
    %181 = vmatpush1.bf16.msra.mxu0 %v159
    %182 = vmatprep.subr.bf16.mxu0 0
    %183 = vmatpush1.bf16.msra.mxu0 %v158
    %184 = vmatprep.subr.bf16.mxu0 0
    %185 = vmatpush1.bf16.msra.mxu0 %v157
    %186 = vmatprep.subr.bf16.mxu0 0
    %187 = vmatpush1.bf16.msra.mxu0 %v156
    %188 = vmatprep.subr.bf16.mxu0 0
    %189 = vmatpush2.bf16.msra.mxu0 0
    %190 = vmatprep.subr.bf16.mxu0 0
    %191 = vmatpush2.bf16.msra.mxu0 0
    %192 = vmatprep.subr.bf16.mxu0 0
    %193 = vmatpush2.bf16.msra.mxu0 0
    %194 = vmatprep.subr.bf16.mxu0 0
    %195 = vmatpush2.bf16.msra.mxu0 0
    %196 = vmatprep.subr.bf16.mxu0 0
    %197 = vmatpush2.bf16.msra.mxu0 0
    %198 = vmatprep.subr.bf16.mxu0 0
    %199 = vmatpush2.bf16.msra.mxu0 0
    %200 = vmatprep.subr.bf16.mxu0 0
    %201 = vmatpush2.bf16.msra.mxu0 0
    %202 = vmatprep.subr.bf16.mxu0 0
    %203 = vmatpush2.bf16.msra.mxu0 0
    %204 = vmatprep.mubr.bf16.mxu0 0
    %205 = vmatmul.mubr.bf16.gmra.mxu0 %v122
    %v206 = vpop.f32.mrf.mxu0
    %v207 = vadd.f32 0.0, %v206
    %v208 = vpop.f32.mrf.mxu0
    %v209 = vpop.f32.mrf.mxu0
    %v210 = vadd.f32 0.0, %v209
    %v211 = vpop.f32.mrf.mxu0
    %212 = vdwg.mxu0
    %v213 = vadd.f32 %v100, %v207
    %v214 = vadd.f32 %v101, %v210
    %215 = vst [vmem:[#allocation2] sm:$0xff] %v213
    %216 = vst [vmem:[#allocation2 + $0x8] sm:$0xff] %v214
    %v217 = vld [vmem:[#allocation3] sm:$0xff]
    %v218 = vld [vmem:[#allocation3 + $0x8] sm:$0xff]
    %v219 = vld [vmem:[#allocation10] sm:$0xf]
    %v220 = vld [vmem:[#allocation10 + $0x4] sm:$0xf]
    %v221 = vld [vmem:[#allocation10 + $0x8] sm:$0xf]
    %v222 = vld [vmem:[#allocation10 + $0xc] sm:$0xf]
    %v223 = vld [vmem:[#allocation10 + $0x10] sm:$0xf]
    %v224 = vld [vmem:[#allocation10 + $0x14] sm:$0xf]
    %v225 = vld [vmem:[#allocation10 + $0x18] sm:$0xf]
    %v226 = vld [vmem:[#allocation10 + $0x1c] sm:$0xf]
    %v227 = vld [vmem:[#allocation10 + $0x20] sm:$0xf]
    %v228 = vld [vmem:[#allocation10 + $0x24] sm:$0xf]
    %v229 = vld [vmem:[#allocation10 + $0x28] sm:$0xf]
    %v230 = vld [vmem:[#allocation10 + $0x2c] sm:$0xf]
    %v231 = vld [vmem:[#allocation10 + $0x30] sm:$0xf]
    %v232 = vld [vmem:[#allocation10 + $0x34] sm:$0xf]
    %v233 = vld [vmem:[#allocation10 + $0x38] sm:$0xf]
    %v234 = vld [vmem:[#allocation10 + $0x3c] sm:$0xf]
    %v251 = vunpack.c.l.b16 %v219
    %v252 = vunpack.c.l.b16 %v220
    %v253 = vunpack.c.l.b16 %v221
    %v254 = vunpack.c.l.b16 %v222
    %v255 = vunpack.c.l.b16 %v223
    %v256 = vunpack.c.l.b16 %v224
    %v257 = vunpack.c.l.b16 %v225
    %v258 = vunpack.c.l.b16 %v226
    %v259 = vunpack.c.l.b16 %v227
    %v260 = vunpack.c.l.b16 %v228
    %v261 = vunpack.c.l.b16 %v229
    %v262 = vunpack.c.l.b16 %v230
    %v263 = vunpack.c.l.b16 %v231
    %v264 = vunpack.c.l.b16 %v232
    %v265 = vunpack.c.l.b16 %v233
    %v266 = vunpack.c.l.b16 %v234
    %v267 = vpack.c.b16 %v252, %v251
    %v268 = vpack.c.b16 %v254, %v253
    %v269 = vpack.c.b16 %v256, %v255
    %v270 = vpack.c.b16 %v258, %v257
    %v271 = vpack.c.b16 %v260, %v259
    %v272 = vpack.c.b16 %v262, %v261
    %v273 = vpack.c.b16 %v264, %v263
    %v274 = vpack.c.b16 %v266, %v265
    %283 = vmatprep.subr.bf16.mxu0 0
    %284 = vmatpush1.bf16.msra.mxu0 %v274
    %285 = vmatprep.subr.bf16.mxu0 0
    %286 = vmatpush1.bf16.msra.mxu0 %v273
    %287 = vmatprep.subr.bf16.mxu0 0
    %288 = vmatpush1.bf16.msra.mxu0 %v272
    %289 = vmatprep.subr.bf16.mxu0 0
    %290 = vmatpush1.bf16.msra.mxu0 %v271
    %291 = vmatprep.subr.bf16.mxu0 0
    %292 = vmatpush1.bf16.msra.mxu0 %v270
    %293 = vmatprep.subr.bf16.mxu0 0
    %294 = vmatpush1.bf16.msra.mxu0 %v269
    %295 = vmatprep.subr.bf16.mxu0 0
    %296 = vmatpush1.bf16.msra.mxu0 %v268
    %297 = vmatprep.subr.bf16.mxu0 0
    %298 = vmatpush1.bf16.msra.mxu0 %v267
    %299 = vmatprep.subr.bf16.mxu0 0
    %300 = vmatpush2.bf16.msra.mxu0 0
    %301 = vmatprep.subr.bf16.mxu0 0
    %302 = vmatpush2.bf16.msra.mxu0 0
    %303 = vmatprep.subr.bf16.mxu0 0
    %304 = vmatpush2.bf16.msra.mxu0 0
    %305 = vmatprep.subr.bf16.mxu0 0
    %306 = vmatpush2.bf16.msra.mxu0 0
    %307 = vmatprep.subr.bf16.mxu0 0
    %308 = vmatpush2.bf16.msra.mxu0 0
    %309 = vmatprep.subr.bf16.mxu0 0
    %310 = vmatpush2.bf16.msra.mxu0 0
    %311 = vmatprep.subr.bf16.mxu0 0
    %312 = vmatpush2.bf16.msra.mxu0 0
    %313 = vmatprep.subr.bf16.mxu0 0
    %314 = vmatpush2.bf16.msra.mxu0 0
    %315 = vmatprep.mubr.bf16.mxu0 0
    %316 = vmatmul.mubr.bf16.gmra.mxu0 %v122
    %v317 = vpop.f32.mrf.mxu0
    %v318 = vadd.f32 0.0, %v317
    %v319 = vpop.f32.mrf.mxu0
    %v320 = vpop.f32.mrf.mxu0
    %v321 = vadd.f32 0.0, %v320
    %v322 = vpop.f32.mrf.mxu0
    %323 = vdwg.mxu0
    %v324 = vadd.f32 %v217, %v318
    %v325 = vadd.f32 %v218, %v321
    %326 = vst [vmem:[#allocation3] sm:$0xff] %v324
    %327 = vst [vmem:[#allocation3 + $0x8] sm:$0xff] %v325
    // Predicated region
    $region54: #{tpu_custom_call.1} parent=1 // pred_check
      %p328 = pneg %p84
    $region55: #{tpu_custom_call.1} parent=1 // pred_check_branch
      %330 = sbr.rel (%p328) target = $region57
    $region56: #{tpu_custom_call.1} parent=1 // pred_region
      %v331 = vld [vmem:[#allocation2] sm:$0xff]
      %v332 = vld [vmem:[#allocation2 + $0x8] sm:$0xff]
      %v333 = vld [vmem:[%s3] sm:$0x1]
      %v335 = vlaneseq
      %v336 = vshrl.u32 %v335, 7
      %v337 = vsub.s32 0, %v336
      %v338 = vrot.slane %v333, %v337
      %v340 = vadd.f32 %v331, %v338
      %v341 = vadd.f32 %v332, %v338
      %v342 = vld [vmem:[#allocation3] sm:$0xff]
      %v343 = vld [vmem:[#allocation3 + $0x8] sm:$0xff]
      %v344 = vld [vmem:[%s4] sm:$0x1]
      %v346 = vlaneseq
      %v347 = vshrl.u32 %v346, 7
      %v348 = vsub.s32 0, %v347
      %v349 = vrot.slane %v344, %v348
      %v351 = vadd.f32 %v342, %v349
      %v352 = vadd.f32 %v343, %v349
      %v353 = vxor.u32 %v351, 2147483648
      %v354 = vxor.u32 %v352, 2147483648
      %v355 = vmul.f32 %v353, 1.442695
      %v356 = vpow.pop %v355
      %v357 = vmul.f32 %v354, 1.442695
      %v358 = vpow.pop %v357
      %v359 = vadd.f32 %v356, 1.0
      %v360 = vadd.f32 %v358, 1.0
      %v361 = vrcp.pop %v359
      %v362 = vmul.f32 1.0, %v361
      %v363 = vrcp.pop %v360
      %v364 = vmul.f32 1.0, %v363
      %v365 = vmul.f32 %v351, %v362
      %v366 = vmul.f32 %v352, %v364
      %v367 = vmul.f32 %v340, %v365
      %v368 = vmul.f32 %v341, %v366
      %v369 = vpack.c.bf16 %v368, %v367
      %v370 = vld [vmem:[#allocation4] sm:$0xff]
      %v371 = vld [vmem:[#allocation4 + $0x8] sm:$0xff]
      %v372 = vld [vmem:[#allocation11] sm:$0xf]
      %v373 = vld [vmem:[#allocation11 + $0x4] sm:$0xf]
      %v374 = vld [vmem:[#allocation11 + $0x8] sm:$0xf]
      %v375 = vld [vmem:[#allocation11 + $0xc] sm:$0xf]
      %v376 = vld [vmem:[#allocation11 + $0x10] sm:$0xf]
      %v377 = vld [vmem:[#allocation11 + $0x14] sm:$0xf]
      %v378 = vld [vmem:[#allocation11 + $0x18] sm:$0xf]
      %v379 = vld [vmem:[#allocation11 + $0x1c] sm:$0xf]
      %v380 = vld [vmem:[#allocation11 + $0x20] sm:$0xf]
      %v381 = vld [vmem:[#allocation11 + $0x24] sm:$0xf]
      %v382 = vld [vmem:[#allocation11 + $0x28] sm:$0xf]
      %v383 = vld [vmem:[#allocation11 + $0x2c] sm:$0xf]
      %v384 = vld [vmem:[#allocation11 + $0x30] sm:$0xf]
      %v385 = vld [vmem:[#allocation11 + $0x34] sm:$0xf]
      %v386 = vld [vmem:[#allocation11 + $0x38] sm:$0xf]
      %v387 = vld [vmem:[#allocation11 + $0x3c] sm:$0xf]
      %v404 = vunpack.c.l.b16 %v372
      %v405 = vunpack.c.l.b16 %v373
      %v406 = vunpack.c.l.b16 %v374
      %v407 = vunpack.c.l.b16 %v375
      %v408 = vunpack.c.l.b16 %v376
      %v409 = vunpack.c.l.b16 %v377
      %v410 = vunpack.c.l.b16 %v378
      %v411 = vunpack.c.l.b16 %v379
      %v412 = vunpack.c.l.b16 %v380
      %v413 = vunpack.c.l.b16 %v381
      %v414 = vunpack.c.l.b16 %v382
      %v415 = vunpack.c.l.b16 %v383
      %v416 = vunpack.c.l.b16 %v384
      %v417 = vunpack.c.l.b16 %v385
      %v418 = vunpack.c.l.b16 %v386
      %v419 = vunpack.c.l.b16 %v387
      %v420 = vpack.c.b16 %v405, %v404
      %v421 = vpack.c.b16 %v407, %v406
      %v422 = vpack.c.b16 %v409, %v408
      %v423 = vpack.c.b16 %v411, %v410
      %v424 = vpack.c.b16 %v413, %v412
      %v425 = vpack.c.b16 %v415, %v414
      %v426 = vpack.c.b16 %v417, %v416
      %v427 = vpack.c.b16 %v419, %v418
      %436 = vmatprep.subr.bf16.mxu0 0
      %437 = vmatpush1.bf16.msra.mxu0 %v427
      %438 = vmatprep.subr.bf16.mxu0 0
      %439 = vmatpush1.bf16.msra.mxu0 %v426
      %440 = vmatprep.subr.bf16.mxu0 0
      %441 = vmatpush1.bf16.msra.mxu0 %v425
      %442 = vmatprep.subr.bf16.mxu0 0
      %443 = vmatpush1.bf16.msra.mxu0 %v424
      %444 = vmatprep.subr.bf16.mxu0 0
      %445 = vmatpush1.bf16.msra.mxu0 %v423
      %446 = vmatprep.subr.bf16.mxu0 0
      %447 = vmatpush1.bf16.msra.mxu0 %v422
      %448 = vmatprep.subr.bf16.mxu0 0
      %449 = vmatpush1.bf16.msra.mxu0 %v421
      %450 = vmatprep.subr.bf16.mxu0 0
      %451 = vmatpush1.bf16.msra.mxu0 %v420
      %452 = vmatprep.subr.bf16.mxu0 0
      %453 = vmatpush2.bf16.msra.mxu0 0
      %454 = vmatprep.subr.bf16.mxu0 0
      %455 = vmatpush2.bf16.msra.mxu0 0
      %456 = vmatprep.subr.bf16.mxu0 0
      %457 = vmatpush2.bf16.msra.mxu0 0
      %458 = vmatprep.subr.bf16.mxu0 0
      %459 = vmatpush2.bf16.msra.mxu0 0
      %460 = vmatprep.subr.bf16.mxu0 0
      %461 = vmatpush2.bf16.msra.mxu0 0
      %462 = vmatprep.subr.bf16.mxu0 0
      %463 = vmatpush2.bf16.msra.mxu0 0
      %464 = vmatprep.subr.bf16.mxu0 0
      %465 = vmatpush2.bf16.msra.mxu0 0
      %466 = vmatprep.subr.bf16.mxu0 0
      %467 = vmatpush2.bf16.msra.mxu0 0
      %468 = vmatprep.mubr.bf16.mxu0 0
      %469 = vmatmul.mubr.bf16.gmra.mxu0 %v369
      %v470 = vpop.f32.mrf.mxu0
      %v471 = vadd.f32 0.0, %v470
      %v472 = vpop.f32.mrf.mxu0
      %v473 = vpop.f32.mrf.mxu0
      %v474 = vadd.f32 0.0, %v473
      %v475 = vpop.f32.mrf.mxu0
      %476 = vdwg.mxu0
      %v477 = vadd.f32 %v370, %v471
      %v478 = vadd.f32 %v371, %v474
      %479 = vst [vmem:[#allocation4] sm:$0xff] %v477
      %480 = vst [vmem:[#allocation4 + $0x8] sm:$0xff] %v478
    $region57: #{tpu_custom_call.1} parent=1 // pred_fallthru
      _
    // Predicated region
    $region58: #{tpu_custom_call.1} parent=1 // pred_check
      _
    $region59: #{tpu_custom_call.1} parent=1 // pred_check_branch
      %482 = sbr.rel (%p85) target = $region61
    $region60: #{tpu_custom_call.1} parent=1 // pred_region
      %v483 = vld [vmem:[#allocation4] sm:$0xff]
      %v484 = vld [vmem:[#allocation4 + $0x8] sm:$0xff]
      %v485 = vld [vmem:[%s6] sm:$0x1]
      %v487 = vlaneseq
      %v488 = vshrl.u32 %v487, 7
      %v489 = vsub.s32 0, %v488
      %v490 = vrot.slane %v485, %v489
      %v492 = vadd.f32 %v483, %v490
      %v493 = vadd.f32 %v484, %v490
      %494 = vst [vmem:[#allocation13] sm:$0xff] %v492
      %495 = vst [vmem:[#allocation13 + $0x8] sm:$0xff] %v493
    $region61: #{tpu_custom_call.1} parent=1 // pred_fallthru
      _
    // Predicated region
    $region62: #{tpu_custom_call.1} parent=1 // pred_check
      _
    $region63: #{tpu_custom_call.1} parent=1 // pred_check_branch
      %497 = sbr.rel (0) target = $region65
    $region64: #{tpu_custom_call.1} parent=1 // pred_region
      %s499 = ssub.s32 256, 256
      %500 = vsyncadd [#allocation7], %s499
      %s501 = sshll.u32 [#allocation13], 4
      %s502 = int_to_ptr.vmem [resolvable:$true] %s501
      %507 = dma.vmem_to_hbm [thread:$0]  %s502, 256, %s7, [#allocation7], 128, 128, 8
    $region65: #{tpu_custom_call.1} parent=1 // pred_fallthru
      _
    // Predicated region
    $region66: #{tpu_custom_call.1} parent=1 // pred_check
      _
    $region67: #{tpu_custom_call.1} parent=1 // pred_check_branch
      %509 = sbr.rel (0) target = $region69
    $region68: #{tpu_custom_call.1} parent=1 // pred_region
      %510 = dma.done [#allocation7], 256
    $region69: #{tpu_custom_call.1} parent=1 // pred_fallthru
      _
    %511 = vsyncpa [#allocation6], 1
    %512 = vsyncpa [#allocation9], 1
    %513 = vsyncpa [#allocation12], 1
    %514 = vsyncpa [#allocation7], 1

</llo_original>
